<compile_context>
chip_gen: v7x
topology: tpu7x:2x2x1
jax: 0.10.0
libtpu: 0.0.40
codegen_flags: <defaults>
</compile_context>

<pallas_src>
import functools

import jax
import jax.numpy as jnp
from jax.experimental import pallas as pl
from jax.experimental.pallas import tpu as pltpu

LANES = 128      # lane width (last dim of every tile)
ROW_TILE = 2048  # rows per grid step: 2048*128*4 B = 1 MiB per f32 input tile


def _recall_kernel(pred_ref, targ_ref, tp_ref, pos_ref, *, ragged, last_tile_rows):
    i = pl.program_id(0)
    nsteps = pl.num_programs(0)

    # Output block index is constant across the grid -> resident accumulator.
    @pl.when(i == 0)
    def _init():
        tp_ref[...] = jnp.zeros_like(tp_ref)
        pos_ref[...] = jnp.zeros_like(pos_ref)

    logits = pred_ref[...]
    tgt = targ_ref[...]

    def accumulate(pos_bool):
        # Fused mask math; sigmoid(x) > 0.5  <=>  x > 0 (no transcendentals).
        pos_c = pos_bool.astype(jnp.int32)
        tp_c = jnp.where(logits > 0, pos_c, 0)
        # Lane-local partial sums: only a cross-sublane reduce per step.
        pos_ref[...] += jnp.sum(pos_c, axis=0, keepdims=True)
        tp_ref[...] += jnp.sum(tp_c, axis=0, keepdims=True)

    if ragged:
        # Only the last grid step pays for the row-validity mask.
        @pl.when(i != nsteps - 1)
        def _full_tile():
            accumulate(tgt > 0)

        @pl.when(i == nsteps - 1)
        def _last_tile():
            row_idx = jax.lax.broadcasted_iota(jnp.int32, tgt.shape, 0)
            valid = row_idx < last_tile_rows
            accumulate(jnp.logical_and(valid, tgt > 0))
    else:
        accumulate(tgt > 0)


def recall_pallas(predicted: jax.Array, target: jax.Array) -> jax.Array:
    """Binary recall of sigmoid(predicted) thresholded at 0.5 vs. target."""
    # Defensive: widen bool refs (awkward packed layout) to int8; all other
    # dtypes (f32/bf16/int8/...) are streamed natively — `> 0` is dtype-agnostic.
    if predicted.dtype == jnp.bool_:
        predicted = predicted.astype(jnp.int8)
    if target.dtype == jnp.bool_:
        target = target.astype(jnp.int8)

    pred_flat = predicted.reshape(-1)   # reshape of contiguous array: no copy
    targ_flat = target.reshape(-1)
    n = pred_flat.shape[0]

    rows = n // LANES
    rem = n - rows * LANES

    tp = jnp.int32(0)
    pos = jnp.int32(0)

    if rows > 0:
        main_n = rows * LANES
        if rem:
            # Only hit when numel % 128 != 0 (rare); the aligned case is copy-free.
            pred_main = jax.lax.slice(pred_flat, (0,), (main_n,))
            targ_main = jax.lax.slice(targ_flat, (0,), (main_n,))
        else:
            pred_main = pred_flat
            targ_main = targ_flat

        pred2d = pred_main.reshape(rows, LANES)
        targ2d = targ_main.reshape(rows, LANES)

        # Tile rows: full extent for small inputs, else 2048 (multiple of 32,
        # so legal sublane granularity for f32/bf16/int8 blocks alike).
        row_tile = rows if rows < ROW_TILE else ROW_TILE
        num_tiles = -(-rows // row_tile)
        ragged = (rows % row_tile) != 0
        last_tile_rows = rows - (num_tiles - 1) * row_tile

        kernel = functools.partial(
            _recall_kernel, ragged=ragged, last_tile_rows=last_tile_rows)

        tp_part, pos_part = pl.pallas_call(
            kernel,
            out_shape=(
                jax.ShapeDtypeStruct((1, LANES), jnp.int32),
                jax.ShapeDtypeStruct((1, LANES), jnp.int32),
            ),
            grid_spec=pltpu.PrefetchScalarGridSpec(
                num_scalar_prefetch=0,
                grid=(num_tiles,),
                in_specs=[
                    pl.BlockSpec((row_tile, LANES), lambda i: (i, 0)),
                    pl.BlockSpec((row_tile, LANES), lambda i: (i, 0)),
                ],
                out_specs=[
                    pl.BlockSpec((1, LANES), lambda i: (0, 0)),
                    pl.BlockSpec((1, LANES), lambda i: (0, 0)),
                ],
            ),
            compiler_params=pltpu.CompilerParams(
                dimension_semantics=("arbitrary",)),
        )(pred2d, targ2d)

        tp = tp + jnp.sum(tp_part)
        pos = pos + jnp.sum(pos_part)

    if rem:
        # Tiny (<128 element) tail folded in plain XLA — avoids any full-array
        # pad/copy of the inputs.
        pred_tail = jax.lax.slice(pred_flat, (rows * LANES,), (n,))
        targ_tail = jax.lax.slice(targ_flat, (rows * LANES,), (n,))
        pos_tail = targ_tail > 0
        tp = tp + jnp.sum(
            jnp.logical_and(pred_tail > 0, pos_tail).astype(jnp.int32))
        pos = pos + jnp.sum(pos_tail.astype(jnp.int32))

    tp_f = tp.astype(jnp.float32)
    pos_f = pos.astype(jnp.float32)
    return jnp.where(pos_f > 0, tp_f / jnp.maximum(pos_f, 1.0), jnp.float32(0.0))


def recall_ref(predicted: jax.Array, target: jax.Array) -> jax.Array:
    probs = jax.nn.sigmoid(predicted.astype(jnp.float32))
    hard = (probs > 0.5).astype(jnp.float32)
    tgt = (target > 0).astype(jnp.float32)
    tp = jnp.sum(hard * tgt)
    pos = jnp.sum(tgt)
    return jnp.where(pos > 0, tp / jnp.maximum(pos, 1.0), 0.0)


if __name__ == "__main__":
    key = jax.random.PRNGKey(0)
    k1, k2 = jax.random.split(key)

    # NCHW logits and binary targets, small shapes.
    B, C, H, W = 2, 4, 16, 16
    predicted = jax.random.normal(k1, (B, C, H, W), dtype=jnp.float32)
    target = (jax.random.uniform(k2, (B, C, H, W)) > 0.5).astype(jnp.float32)

    out = recall_pallas(predicted, target)
    jax.block_until_ready(out)

    ref = recall_ref(predicted, target)
    assert jnp.allclose(out, ref, atol=1e-6), (out, ref)

    print("KERNEL_OK")
</pallas_src>

<mosaic_0001>
module attributes {stable_mosaic.version = 11 : i64} {
  func.func @_recall_kernel(%arg0: i32, %arg1: memref<16x128xf32, #tpu.memory_space<vmem>>, %arg2: memref<16x128xf32, #tpu.memory_space<vmem>>, %arg3: memref<1x128xi32, #tpu.memory_space<vmem>>, %arg4: memref<1x128xi32, #tpu.memory_space<vmem>>) attributes {dimension_semantics = [#tpu.dimension_semantics<arbitrary>], iteration_bounds = array<i64: 1>, scalar_prefetch = 0 : i64, scratch_operands = 0 : i64, tpu.core_type = #tpu.core_type<tc>, window_params = [{transform_indices = @transform_0, window_bounds = array<i64: 16, 128>}, {transform_indices = @transform_1, window_bounds = array<i64: 16, 128>}, {pipeline_mode = #tpu.pipeline_mode<synchronous>, transform_indices = @transform_2, window_bounds = array<i64: 1, 128>}, {pipeline_mode = #tpu.pipeline_mode<synchronous>, transform_indices = @transform_3, window_bounds = array<i64: 1, 128>}]} {
    %c0_i32 = arith.constant 0 : i32
    %0 = arith.cmpi eq, %arg0, %c0_i32 : i32
    %1 = arith.extui %0 : i1 to i32
    %c0_i32_0 = arith.constant 0 : i32
    %2 = arith.cmpi ne, %1, %c0_i32_0 : i32
    scf.if %2 {
      %c0_i32_16 = arith.constant 0 : i32
      %22 = vector.broadcast %c0_i32_16 : i32 to vector<1x128xi32>
      %c0_17 = arith.constant 0 : index
      %c0_18 = arith.constant 0 : index
      %23 = vector.load %arg3[%c0_17, %c0_18] : memref<1x128xi32, #tpu.memory_space<vmem>>, vector<1x128xi32>
      tpu.vector_store %arg3[%c0_17, %c0_18], %22 {strides = array<i32>} : memref<1x128xi32, #tpu.memory_space<vmem>>, vector<1x128xi32>,
      %c0_i32_19 = arith.constant 0 : i32
      %24 = vector.broadcast %c0_i32_19 : i32 to vector<1x128xi32>
      %c0_20 = arith.constant 0 : index
      %c0_21 = arith.constant 0 : index
      %25 = vector.load %arg4[%c0_20, %c0_21] : memref<1x128xi32, #tpu.memory_space<vmem>>, vector<1x128xi32>
      tpu.vector_store %arg4[%c0_20, %c0_21], %24 {strides = array<i32>} : memref<1x128xi32, #tpu.memory_space<vmem>>, vector<1x128xi32>,
    } else {
    }
    %c0 = arith.constant 0 : index
    %c0_1 = arith.constant 0 : index
    %3 = vector.load %arg1[%c0, %c0_1] : memref<16x128xf32, #tpu.memory_space<vmem>>, vector<16x128xf32>
    %c0_2 = arith.constant 0 : index
    %c0_3 = arith.constant 0 : index
    %4 = vector.load %arg2[%c0_2, %c0_3] : memref<16x128xf32, #tpu.memory_space<vmem>>, vector<16x128xf32>
    %cst = arith.constant 0.000000e+00 : f32
    %5 = vector.broadcast %cst : f32 to vector<16x128xf32>
    %6 = arith.cmpf ogt, %4, %5 : vector<16x128xf32>
    %7 = arith.extui %6 : vector<16x128xi1> to vector<16x128xi32>
    %cst_4 = arith.constant 0.000000e+00 : f32
    %8 = vector.broadcast %cst_4 : f32 to vector<16x128xf32>
    %9 = arith.cmpf ogt, %3, %8 : vector<16x128xf32>
    %c0_i32_5 = arith.constant 0 : i32
    %10 = vector.broadcast %c0_i32_5 : i32 to vector<16x128xi32>
    %11 = arith.select %9, %7, %10 : vector<16x128xi1>, vector<16x128xi32>
    %c0_6 = arith.constant 0 : index
    %c0_7 = arith.constant 0 : index
    %12 = vector.load %arg4[%c0_6, %c0_7] : memref<1x128xi32, #tpu.memory_space<vmem>>, vector<1x128xi32>
    %cst_8 = arith.constant dense<0> : vector<128xi32>
    %13 = vector.multi_reduction <add>, %7, %cst_8 [0] : vector<16x128xi32> to vector<128xi32>
    %14 = vector.shape_cast %13 : vector<128xi32> to vector<1x128xi32>
    %15 = arith.addi %12, %14 : vector<1x128xi32>
    %c0_9 = arith.constant 0 : index
    %c0_10 = arith.constant 0 : index
    %16 = vector.load %arg4[%c0_9, %c0_10] : memref<1x128xi32, #tpu.memory_space<vmem>>, vector<1x128xi32>
    tpu.vector_store %arg4[%c0_9, %c0_10], %15 {strides = array<i32>} : memref<1x128xi32, #tpu.memory_space<vmem>>, vector<1x128xi32>,
    %c0_11 = arith.constant 0 : index
    %c0_12 = arith.constant 0 : index
    %17 = vector.load %arg3[%c0_11, %c0_12] : memref<1x128xi32, #tpu.memory_space<vmem>>, vector<1x128xi32>
    %cst_13 = arith.constant dense<0> : vector<128xi32>
    %18 = vector.multi_reduction <add>, %11, %cst_13 [0] : vector<16x128xi32> to vector<128xi32>
    %19 = vector.shape_cast %18 : vector<128xi32> to vector<1x128xi32>
    %20 = arith.addi %17, %19 : vector<1x128xi32>
    %c0_14 = arith.constant 0 : index
    %c0_15 = arith.constant 0 : index
    %21 = vector.load %arg3[%c0_14, %c0_15] : memref<1x128xi32, #tpu.memory_space<vmem>>, vector<1x128xi32>
    tpu.vector_store %arg3[%c0_14, %c0_15], %20 {strides = array<i32>} : memref<1x128xi32, #tpu.memory_space<vmem>>, vector<1x128xi32>,
    return
  }
  func.func @transform_0(%arg0: i32) -> (i32, i32) {
    %c0_i32 = arith.constant 0 : i32
    %c0_i32_0 = arith.constant 0 : i32
    return %arg0, %c0_i32 : i32, i32
  }
  func.func @transform_1(%arg0: i32) -> (i32, i32) {
    %c0_i32 = arith.constant 0 : i32
    %c0_i32_0 = arith.constant 0 : i32
    return %arg0, %c0_i32 : i32, i32
  }
  func.func @transform_2(%arg0: i32) -> (i32, i32) {
    %c0_i32 = arith.constant 0 : i32
    %c0_i32_0 = arith.constant 0 : i32
    %c0_i32_1 = arith.constant 0 : i32
    return %c0_i32, %c0_i32_0 : i32, i32
  }
  func.func @transform_3(%arg0: i32) -> (i32, i32) {
    %c0_i32 = arith.constant 0 : i32
    %c0_i32_0 = arith.constant 0 : i32
    %c0_i32_1 = arith.constant 0 : i32
    return %c0_i32, %c0_i32_0 : i32, i32
  }
}

</mosaic_0001>

<llo_original>
// kernel: tpu_custom_call.1
$region0: #{tpu_custom_call.1}
  #allocation0 [shape = 'u32[]', space=smem, size = 0x4, offset = 0x4, fixed_abs, tag = 'smem constant byte address 0x4 - core index']
  #allocation1 [shape = 'u32[144,128]{1,0:T(1,128)}', space=vmem, size = 0x12000, scoped, tag = 'internal scratch']
  %s0 = inlined_call_operand.hbm [shape: f32[16,128], index: 0, kind: input, shape index: {}]
  %s1 = inlined_call_operand.hbm [shape: f32[16,128], index: 1, kind: input, shape index: {}]
  %s2 = inlined_call_operand.hbm [shape: s32[1,128], index: 2, kind: output, shape index: {0}]
  %s3 = inlined_call_operand.hbm [shape: s32[1,128], index: 3, kind: output, shape index: {1}]
  %4 = xla_tuple %s2, %s3
  %s5 = sld [smem:[#allocation0]]
  $region38: #{tpu_custom_call.1} parent=0
    _
  %s7 = ssub.s32 1, %s5
  %s8 = scalar_select 0, %s7, %s5
  $region1: #{tpu_custom_call.1} parent=0
    #allocation2 [shape = 'u8[8192]{0}', space=vmem, size = 0x2000, scoped, tag = 'input window, operand 0, single buffered']
    #allocation3 [shape = 's32[1]{0}', space=sflag, size = 0x4, scoped, tag = 'scoped memory for tpu_custom_call.1']
    #allocation4 [shape = 's32[1]{0}', space=sflag, size = 0x4, scoped, tag = 'scoped memory for tpu_custom_call.1']
    #allocation5 [shape = 'u8[8192]{0}', space=vmem, size = 0x2000, scoped, tag = 'input window, operand 1, single buffered']
    #allocation6 [shape = 's32[1]{0}', space=sflag, size = 0x4, scoped, tag = 'scoped memory for tpu_custom_call.1']
    #allocation7 [shape = 'u8[512]{0}', space=vmem, size = 0x400, scoped, tag = 'output window, operand 0, single buffered']
    #allocation8 [shape = 'u8[512]{0}', space=vmem, size = 0x400, scoped, tag = 'output window, operand 1, single buffered']
    #allocation9 [shape = 's32[1]{0}', space=sflag, size = 0x4, scoped, tag = 'scoped memory for tpu_custom_call.1']
    %9 = vsyncpa [#allocation3], 0
    %10 = vsyncpa [#allocation6], 0
    %11 = vsyncpa [#allocation4], 0
    %12 = vsyncpa [#allocation9], 0
    // Predicated region
    $region2: #{tpu_custom_call.1} parent=1 // pred_check
      _
    $region3: #{tpu_custom_call.1} parent=1 // pred_check_branch
      %14 = sbr.rel (0) target = $region5
    $region4: #{tpu_custom_call.1} parent=1 // pred_region
      %s16 = ssub.s32 256, 256
      %17 = vsyncadd [#allocation3], %s16
      %s18 = sshll.u32 [#allocation2], 4
      %s19 = int_to_ptr.vmem [resolvable:$true] %s18
      %24 = dma.hbm_to_vmem [thread:$0]  %s0, 256, %s19, [#allocation3], 128, 128, 8
    $region5: #{tpu_custom_call.1} parent=1 // pred_fallthru
      _
    // Predicated region
    $region6: #{tpu_custom_call.1} parent=1 // pred_check
      _
    $region7: #{tpu_custom_call.1} parent=1 // pred_check_branch
      %26 = sbr.rel (0) target = $region9
    $region8: #{tpu_custom_call.1} parent=1 // pred_region
      %s28 = ssub.s32 256, 256
      %29 = vsyncadd [#allocation6], %s28
      %s30 = sshll.u32 [#allocation5], 4
      %s31 = int_to_ptr.vmem [resolvable:$true] %s30
      %36 = dma.hbm_to_vmem [thread:$0]  %s1, 256, %s31, [#allocation6], 128, 128, 8
    $region9: #{tpu_custom_call.1} parent=1 // pred_fallthru
      _
    // Predicated region
    $region10: #{tpu_custom_call.1} parent=1 // pred_check
      _
    $region11: #{tpu_custom_call.1} parent=1 // pred_check_branch
      %38 = sbr.rel (0) target = $region13
    $region12: #{tpu_custom_call.1} parent=1 // pred_region
      %39 = dma.done [#allocation3], 256
    $region13: #{tpu_custom_call.1} parent=1 // pred_fallthru
      _
    // Predicated region
    $region14: #{tpu_custom_call.1} parent=1 // pred_check
      _
    $region15: #{tpu_custom_call.1} parent=1 // pred_check_branch
      %41 = sbr.rel (0) target = $region17
    $region16: #{tpu_custom_call.1} parent=1 // pred_region
      %42 = dma.done [#allocation6], 256
    $region17: #{tpu_custom_call.1} parent=1 // pred_fallthru
      _
    %p43 = scmp.eq.s32.totalorder 0, 0
    // Predicated region
    $region18: #{tpu_custom_call.1} parent=1 // pred_check
      %p44 = pneg %p43
    $region19: #{tpu_custom_call.1} parent=1 // pred_check_branch
      %46 = sbr.rel (%p44) target = $region21
    $region20: #{tpu_custom_call.1} parent=1 // pred_region
      %47 = vst [vmem:[#allocation7] sm:$0x1] 0
      %48 = vst [vmem:[#allocation8] sm:$0x1] 0
    $region21: #{tpu_custom_call.1} parent=1 // pred_fallthru
      _
    %v49 = vld [vmem:[#allocation2] sm:$0xff]
    %v50 = vld [vmem:[#allocation2 + $0x8] sm:$0xff]
    %v51 = vld [vmem:[#allocation5] sm:$0xff]
    %v52 = vld [vmem:[#allocation5 + $0x8] sm:$0xff]
    %vm53 = vcmp.gt.f32.partialorder %v51, 0.0
    %vm54 = vcmp.gt.f32.partialorder %v52, 0.0
    %v55 = vsel %vm53, 1, 0
    %v56 = vsel %vm54, 1, 0
    %vm57 = vcmp.gt.f32.partialorder %v49, 0.0
    %vm58 = vcmp.gt.f32.partialorder %v50, 0.0
    %v59 = vsel %vm57, %v55, 0
    %v60 = vsel %vm58, %v56, 0
    %v61 = vld [vmem:[#allocation8] sm:$0x1]
    %v62 = vadd.s32 %v55, %v56
    %v63 = vrot.slane %v62, 4
    %v64 = vadd.s32 %v62, %v63
    %v65 = vrot.slane %v64, 2
    %v66 = vadd.s32 %v64, %v65
    %v67 = vrot.slane %v66, 1
    %v68 = vadd.s32 %v66, %v67
    %v69 = vadd.s32 %v61, %v68
    %70 = vst [vmem:[#allocation8] sm:$0x1] %v69
    %v71 = vld [vmem:[#allocation7] sm:$0x1]
    %v72 = vadd.s32 %v59, %v60
    %v73 = vrot.slane %v72, 4
    %v74 = vadd.s32 %v72, %v73
    %v75 = vrot.slane %v74, 2
    %v76 = vadd.s32 %v74, %v75
    %v77 = vrot.slane %v76, 1
    %v78 = vadd.s32 %v76, %v77
    %v79 = vadd.s32 %v71, %v78
    %80 = vst [vmem:[#allocation7] sm:$0x1] %v79
    // Predicated region
    $region22: #{tpu_custom_call.1} parent=1 // pred_check
      _
    $region23: #{tpu_custom_call.1} parent=1 // pred_check_branch
      %82 = sbr.rel (0) target = $region25
    $region24: #{tpu_custom_call.1} parent=1 // pred_region
      %s84 = ssub.s32 16, 16
      %85 = vsyncadd [#allocation4], %s84
      %s87 = sshll.u32 [#allocation7], 4
      %s88 = int_to_ptr.vmem [resolvable:$true] %s87
      %90 = dma.vmem_to_hbm [thread:$0]  %s88, 16, %s2, [#allocation4]
    $region25: #{tpu_custom_call.1} parent=1 // pred_fallthru
      _
    // Predicated region
    $region26: #{tpu_custom_call.1} parent=1 // pred_check
      _
    $region27: #{tpu_custom_call.1} parent=1 // pred_check_branch
      %92 = sbr.rel (0) target = $region29
    $region28: #{tpu_custom_call.1} parent=1 // pred_region
      %s94 = ssub.s32 16, 16
      %95 = vsyncadd [#allocation9], %s94
      %s97 = sshll.u32 [#allocation8], 4
      %s98 = int_to_ptr.vmem [resolvable:$true] %s97
      %100 = dma.vmem_to_hbm [thread:$0]  %s98, 16, %s3, [#allocation9]
    $region29: #{tpu_custom_call.1} parent=1 // pred_fallthru
      _
    // Predicated region
    $region30: #{tpu_custom_call.1} parent=1 // pred_check
      _
    $region31: #{tpu_custom_call.1} parent=1 // pred_check_branch
      %102 = sbr.rel (0) target = $region33
    $region32: #{tpu_custom_call.1} parent=1 // pred_region
      %103 = dma.done [#allocation4], 16
    $region33: #{tpu_custom_call.1} parent=1 // pred_fallthru
      _
    // Predicated region
    $region34: #{tpu_custom_call.1} parent=1 // pred_check
      _
    $region35: #{tpu_custom_call.1} parent=1 // pred_check_branch
      %105 = sbr.rel (0) target = $region37
    $region36: #{tpu_custom_call.1} parent=1 // pred_region
      %106 = dma.done [#allocation9], 16
    $region37: #{tpu_custom_call.1} parent=1 // pred_fallthru
      _
    %107 = vsyncpa [#allocation3], 1
    %108 = vsyncpa [#allocation6], 1
    %109 = vsyncpa [#allocation4], 1
    %110 = vsyncpa [#allocation9], 1

</llo_original>
